<compile_context>
chip_gen: v6e
topology: v6e:2x2x1
jax: 0.10.0
libtpu: 0.0.40
codegen_flags: <defaults>
</compile_context>

<pallas_src>
import math

import jax
import jax.numpy as jnp
from jax.experimental import pallas as pl
from jax.experimental.pallas import tpu as pltpu


def _bias_kernel(b_ref, x_ref, o_ref):
    # b_ref is (TR, 1) (lane broadcast) or (1, TL) (sublane broadcast);
    # either way this is one VPU add per vreg.
    o_ref[...] = x_ref[...] + b_ref[...]


def _floor_mult(v, m):
    return (v // m) * m


def _ceil_mult(v, m):
    return ((v + m - 1) // m) * m


def _pick_tiles(R, L, itemsize, sub, row_mult, lane_tilable, target_bytes):
    """Pick (TR, TL) so one x block is ~target_bytes and obeys the (8,128) rule."""
    # Lane (last-dim) tile: a multiple of 128, or the full extent.
    if lane_tilable and sub * L * itemsize > target_bytes:
        TL = max(128, _floor_mult(target_bytes // (sub * itemsize), 128))
    else:
        TL = L
    # Row tile: a multiple of the dtype sublane packing (and of row_mult when
    # that keeps the bias block resident), or the full extent.
    rows_budget = max(sub, _floor_mult(target_bytes // max(TL * itemsize, 1), sub))
    if rows_budget >= R:
        TR = R
    else:
        TR = max(row_mult, _floor_mult(rows_budget, row_mult))
        if TR > R:
            TR = R
    return TR, TL


def _dimension_semantics(grid):
    """PARALLEL everywhere; on v7x mark the longest grid axis CORE_PARALLEL so
    the streaming work is actually split across the 2 TensorCores."""
    sems = [pltpu.PARALLEL] * len(grid)
    try:
        kind = jax.devices()[0].device_kind.lower()
    except Exception:
        kind = ""
    if "v7" in kind:
        ax = max(range(len(grid)), key=lambda a: grid[a])
        sems[ax] = pltpu.CORE_PARALLEL
    return tuple(sems)


def bias_forward(x, bias, *, target_block_bytes=6 * 1024 * 1024):
    """x: (N, C, H, W), bias: (C,). Returns x + bias[None, :, None, None]."""
    N, C, H, W = x.shape
    assert bias.shape == (C,)
    dtype = x.dtype
    itemsize = jnp.dtype(dtype).itemsize
    # dtype-native sublane packing: 8 rows (f32), 16 (bf16/f16), 32 (int8/fp8)
    sub = {4: 8, 2: 16, 1: 32}.get(itemsize, 8)
    L = H * W
    b1 = bias.astype(dtype)

    if L % 128 == 0 or (C * L) % 128 != 0:
        # ---- Layout A: (N*C, H*W); bias is constant per row ----
        # Lane-dense whenever H*W % 128 == 0 (the common case); otherwise the
        # last block dim is the full extent (masked stores, still correct).
        # TODO(synk): pad H*W up to a 128 multiple when neither H*W nor C*H*W
        # is 128-aligned (rare shapes) to avoid masked vst.
        R = N * C
        x2 = x.reshape(R, L)
        lane_tilable = (L % 128 == 0)
        lcm_rc = (sub * C) // math.gcd(sub, C)
        row_mult = lcm_rc if lcm_rc <= 4096 else sub
        TR, TL = _pick_tiles(R, L, itemsize, sub, row_mult, lane_tilable,
                             target_block_bytes)
        if TR % C == 0:
            # Resident bias tile: identical (TR, 1) block for every grid step,
            # constant index_map -> no per-step bias DMA.
            b2 = jnp.tile(b1, TR // C).reshape(TR, 1)
            bias_spec = pl.BlockSpec((TR, 1), lambda i, j: (0, 0))
        else:
            b2 = jnp.tile(b1, N).reshape(R, 1)
            bias_spec = pl.BlockSpec((TR, 1), lambda i, j: (i, 0))
        bias_block_bytes = _ceil_mult(TR, sub) * 128 * itemsize
    else:
        # ---- Layout B: (N, C*H*W); one shared bias row, sublane-broadcast ----
        # Lane-dense under the weaker condition C*H*W % 128 == 0.
        R, L = N, C * L
        x2 = x.reshape(R, L)
        TR, TL = _pick_tiles(R, L, itemsize, sub, sub, True, target_block_bytes)
        b2 = jnp.repeat(b1, H * W).reshape(1, L)
        bias_spec = pl.BlockSpec((1, TL), lambda i, j: (0, j))
        bias_block_bytes = sub * _ceil_mult(TL, 128) * itemsize

    grid = (pl.cdiv(R, TR), pl.cdiv(L, TL))
    x_spec = pl.BlockSpec((TR, TL), lambda i, j: (i, j))
    out_spec = pl.BlockSpec((TR, TL), lambda i, j: (i, j))

    # Scoped-VMEM budget: double-buffered input + output blocks + bias copies
    # + slack.  Explicit because ~6 MiB blocks overshoot the scoped defaults
    # (16 MiB v5e / 32 MiB v6e,v7x) while staying inside physical VMEM.
    x_block_bytes = _ceil_mult(TR, sub) * _ceil_mult(TL, 128) * itemsize
    vmem_limit = int(min(48 << 20,
                         max(16 << 20,
                             4 * x_block_bytes + 2 * bias_block_bytes + (2 << 20))))

    def run(dim_sems):
        return pl.pallas_call(
            _bias_kernel,
            out_shape=jax.ShapeDtypeStruct((R, L), dtype),
            grid=grid,
            in_specs=[bias_spec, x_spec],
            out_specs=out_spec,
            compiler_params=pltpu.CompilerParams(
                dimension_semantics=dim_sems,
                vmem_limit_bytes=vmem_limit,
            ),
        )(b2, x2)

    sems = _dimension_semantics(grid)
    if any(s is not pltpu.PARALLEL for s in sems):
        try:
            out2 = run(sems)
        except Exception:
            # CORE_PARALLEL rejected on this chip/runtime: safe fallback.
            out2 = run((pltpu.PARALLEL,) * len(grid))
    else:
        out2 = run(sems)

    return out2.reshape(N, C, H, W)


if __name__ == "__main__":
    N, C, H, W = 2, 4, 16, 16
    key = jax.random.PRNGKey(0)
    kx, kb = jax.random.split(key)
    x = jax.random.normal(kx, (N, C, H, W), dtype=jnp.float32)
    # Module __init__ uses zeros(features); use a deterministic non-zero bias
    # so the broadcast-add is actually exercised.
    bias = jax.random.normal(kb, (C,), dtype=jnp.float32)

    out = bias_forward(x, bias)
    jax.block_until_ready(out)

    ref = x + bias[None, :, None, None]
    assert out.shape == x.shape and out.dtype == x.dtype
    assert jnp.allclose(out, ref, atol=1e-6, rtol=1e-6)
    print("KERNEL_OK")
</pallas_src>

<mosaic_0001>
module attributes {stable_mosaic.version = 11 : i64} {
  func.func @_bias_kernel(%arg0: i32, %arg1: i32, %arg2: memref<8x1xf32, #tpu.memory_space<vmem>>, %arg3: memref<8x256xf32, #tpu.memory_space<vmem>>, %arg4: memref<8x256xf32, #tpu.memory_space<vmem>>) attributes {dimension_semantics = [#tpu.dimension_semantics<parallel>, #tpu.dimension_semantics<parallel>], iteration_bounds = array<i64: 1, 1>, scalar_prefetch = 0 : i64, scratch_operands = 0 : i64, tpu.core_type = #tpu.core_type<tc>, window_params = [{pipeline_mode = #tpu.pipeline_mode<synchronous>, transform_indices = @transform_0, window_bounds = array<i64: 8, 1>}, {transform_indices = @transform_1, window_bounds = array<i64: 8, 256>}, {transform_indices = @transform_2, window_bounds = array<i64: 8, 256>}]} {
    %c0 = arith.constant 0 : index
    %c0_0 = arith.constant 0 : index
    %0 = vector.load %arg3[%c0, %c0_0] : memref<8x256xf32, #tpu.memory_space<vmem>>, vector<8x256xf32>
    %c0_1 = arith.constant 0 : index
    %c0_2 = arith.constant 0 : index
    %1 = vector.load %arg2[%c0_1, %c0_2] : memref<8x1xf32, #tpu.memory_space<vmem>>, vector<8x1xf32>
    %2 = vector.broadcast %1 : vector<8x1xf32> to vector<8x256xf32>
    %3 = arith.addf %0, %2 : vector<8x256xf32>
    %c0_3 = arith.constant 0 : index
    %c0_4 = arith.constant 0 : index
    %4 = vector.load %arg4[%c0_3, %c0_4] : memref<8x256xf32, #tpu.memory_space<vmem>>, vector<8x256xf32>
    tpu.vector_store %arg4[%c0_3, %c0_4], %3 {strides = array<i32>} : memref<8x256xf32, #tpu.memory_space<vmem>>, vector<8x256xf32>,
    return
  }
  func.func @transform_0(%arg0: i32, %arg1: i32) -> (i32, i32) {
    %c0_i32 = arith.constant 0 : i32
    %c0_i32_0 = arith.constant 0 : i32
    %c0_i32_1 = arith.constant 0 : i32
    return %c0_i32, %c0_i32_0 : i32, i32
  }
  func.func @transform_1(%arg0: i32, %arg1: i32) -> (i32, i32) {
    %c0_i32 = arith.constant 0 : i32
    return %arg0, %arg1 : i32, i32
  }
  func.func @transform_2(%arg0: i32, %arg1: i32) -> (i32, i32) {
    %c0_i32 = arith.constant 0 : i32
    return %arg0, %arg1 : i32, i32
  }
}

</mosaic_0001>

<llo_original>
// kernel: tpu_custom_call.1
$region0: #{tpu_custom_call.1}
  #allocation0 [shape = 'u32[]', space=smem, size = 0x4, offset = 0x4, fixed_abs, tag = 'smem constant byte address 0x4 - core index']
  #allocation1 [shape = 'u32[144,128]{1,0:T(1,128)}', space=vmem, size = 0x12000, scoped, tag = 'internal scratch']
  %s0 = inlined_call_operand.vmem [shape: f32[8,1], index: 0, kind: input, shape index: {}]
  %s1 = inlined_call_operand.hbm [shape: f32[8,256], index: 1, kind: input, shape index: {}]
  %s2 = inlined_call_operand.hbm [shape: f32[8,256], index: 2, kind: output, shape index: {}]
  %s3 = sld [smem:[#allocation0]]
  $region22: #{tpu_custom_call.1} parent=0
    _
  %s5 = ssub.s32 1, %s3
  %s6 = scalar_select 0, %s5, %s3
  $region1: #{tpu_custom_call.1} parent=0
    #allocation2 [shape = 'u8[8192]{0}', space=vmem, size = 0x2000, scoped, tag = 'input window, operand 1, single buffered']
    #allocation3 [shape = 's32[1]{0}', space=sflag, size = 0x4, scoped, tag = 'scoped memory for tpu_custom_call.1']
    #allocation4 [shape = 's32[1]{0}', space=sflag, size = 0x4, scoped, tag = 'scoped memory for tpu_custom_call.1']
    #allocation5 [shape = 'u8[8192]{0}', space=vmem, size = 0x2000, scoped, tag = 'output window, operand 0, single buffered']
    %7 = vsyncpa [#allocation3], 0
    %8 = vsyncpa [#allocation4], 0
    // Predicated region
    $region2: #{tpu_custom_call.1} parent=1 // pred_check
      _
    $region3: #{tpu_custom_call.1} parent=1 // pred_check_branch
      %10 = sbr.rel (0) target = $region5
    $region4: #{tpu_custom_call.1} parent=1 // pred_region
      _
    $region5: #{tpu_custom_call.1} parent=1 // pred_fallthru
      _
    // Predicated region
    $region6: #{tpu_custom_call.1} parent=1 // pred_check
      _
    $region7: #{tpu_custom_call.1} parent=1 // pred_check_branch
      %12 = sbr.rel (0) target = $region9
    $region8: #{tpu_custom_call.1} parent=1 // pred_region
      %s14 = ssub.s32 256, 256
      %15 = vsyncadd [#allocation3], %s14
      %s17 = sshll.u32 [#allocation2], 4
      %s18 = int_to_ptr.vmem [resolvable:$true] %s17
      %20 = dma.hbm_to_vmem [thread:$0]  %s1, 256, %s18, [#allocation3]
    $region9: #{tpu_custom_call.1} parent=1 // pred_fallthru
      _
    // Predicated region
    $region10: #{tpu_custom_call.1} parent=1 // pred_check
      _
    $region11: #{tpu_custom_call.1} parent=1 // pred_check_branch
      %22 = sbr.rel (0) target = $region13
    $region12: #{tpu_custom_call.1} parent=1 // pred_region
      %23 = dma.done [#allocation3], 256
    $region13: #{tpu_custom_call.1} parent=1 // pred_fallthru
      _
    %v24 = vld [vmem:[#allocation2] sm:$0xff]
    %v25 = vld [vmem:[#allocation2 + $0x8] sm:$0xff]
    %v26 = vld [vmem:[%s0] sm:$0xff]
    %28 = vset.pattern.permute.xlu0 0
    %29 = vperm.xlu0 %28, %v26
    %v30 = vpop.permute.xlu0 %29
    %v32 = vadd.f32 %v24, %v30
    %v33 = vadd.f32 %v25, %v30
    %34 = vst [vmem:[#allocation5] sm:$0xff] %v32
    %35 = vst [vmem:[#allocation5 + $0x8] sm:$0xff] %v33
    // Predicated region
    $region14: #{tpu_custom_call.1} parent=1 // pred_check
      _
    $region15: #{tpu_custom_call.1} parent=1 // pred_check_branch
      %37 = sbr.rel (0) target = $region17
    $region16: #{tpu_custom_call.1} parent=1 // pred_region
      %s39 = ssub.s32 256, 256
      %40 = vsyncadd [#allocation4], %s39
      %s42 = sshll.u32 [#allocation5], 4
      %s43 = int_to_ptr.vmem [resolvable:$true] %s42
      %45 = dma.vmem_to_hbm [thread:$0]  %s43, 256, %s2, [#allocation4]
    $region17: #{tpu_custom_call.1} parent=1 // pred_fallthru
      _
    // Predicated region
    $region18: #{tpu_custom_call.1} parent=1 // pred_check
      _
    $region19: #{tpu_custom_call.1} parent=1 // pred_check_branch
      %47 = sbr.rel (0) target = $region21
    $region20: #{tpu_custom_call.1} parent=1 // pred_region
      %48 = dma.done [#allocation4], 256
    $region21: #{tpu_custom_call.1} parent=1 // pred_fallthru
      _
    %49 = vsyncpa [#allocation3], 1
    %50 = vsyncpa [#allocation4], 1

</llo_original>
